<compile_context>
chip_gen: v5e
topology: v5e:2x2
jax: 0.10.0
libtpu: 0.0.40
codegen_flags: <defaults>
</compile_context>

<pallas_src>
import functools

import jax
import jax.numpy as jnp
from jax import lax
from jax.experimental import pallas as pl
from jax.experimental.pallas import tpu as pltpu


def _eiie_dense_kernel(x_ref, w_ref, b_ref, o_ref, *,
                       kernel_width, n_tile, h_dim, w_dim):
    # x_ref: (n_tile, C_in,  H*W)       input block, fused (H, W) on lanes
    # w_ref: (KW, C_out, C_in)          conv taps, one (C_out, C_in) matrix per k
    # b_ref: (C_out, 1)                 bias
    # o_ref: (n_tile, C_out, H*W_out)   compact valid output (no junk columns)
    c_in = x_ref.shape[1]
    hw = x_ref.shape[2]
    c_out = o_ref.shape[1]
    kw = kernel_width
    w_out = w_dim - kw + 1
    l_full = hw - kw + 1              # width of the full-width valid accumulator

    # Hoisted loop-invariant values: taps + lane-broadcast bias (f32 accumulator).
    w_taps = [w_ref[k] for k in range(kw)]                          # (C_out, C_in) each
    b_full = jnp.broadcast_to(b_ref[...].astype(jnp.float32), (c_out, l_full))

    def sample_body(i, carry):
        x = x_ref[i]                                                # (C_in, H*W), one load
        acc = b_full
        for k in range(kw):                                         # KW is small & static
            # Lane-shifted view of x; lanes p of the result see x[:, p + k].
            xk = lax.slice(x, (0, k), (c_in, k + l_full))           # (C_in, L)
            acc = acc + jnp.dot(w_taps[k], xk,
                                preferred_element_type=jnp.float32)  # MXU, K = C_in
        res = jnp.maximum(acc, 0.0).astype(o_ref.dtype)             # bias + ReLU, (C_out, L)

        # Compact: valid output for row h lives at lanes [h*W, h*W + W_out) of `res`;
        # pack rows back-to-back so the store (and HBM writeback) is junk-free.
        if w_out == w_dim:
            res_c = res[:, :h_dim * w_out]
        else:
            chunks = [res[:, h * w_dim:h * w_dim + w_out] for h in range(h_dim)]
            res_c = chunks[0] if len(chunks) == 1 else jnp.concatenate(chunks, axis=1)
        o_ref[i] = res_c                                            # (C_out, H*W_out)
        return carry

    lax.fori_loop(0, n_tile, sample_body, 0)


def _pick_n_tile(n, c_in, c_out, hw, hwo, itemsize):
    # Size the batch tile against VMEM: double-buffered input + output blocks,
    # accounting for (8, 128) sublane/lane padding of the VMEM layout.
    def pad(v, m):
        return ((v + m - 1) // m) * m

    per_sample = 2 * itemsize * (pad(c_in, 8) * pad(hw, 128) +
                                 pad(c_out, 8) * pad(hwo, 128))
    budget = 12 * 1024 * 1024                      # leave headroom under the 32 MiB limit
    cap = max(1, min(budget // max(per_sample, 1), 64))
    n_tile = int(min(n, cap))
    while n % n_tile:                              # exact grid, no ragged tail
        n_tile -= 1
    return n_tile


def eiie_dense_forward(x_nchw, weight, bias):
    """Forward pass of EIIEDense.

    x_nchw : (N, C_in, H, W)       float32
    weight : (C_out, C_in, 1, KW)  float32 (PyTorch Conv2d layout)
    bias   : (C_out,)              float32
    returns: (N, C_out, H, W - KW + 1)
    """
    n, c_in, h, w = x_nchw.shape
    c_out, c_in_w, kh, kw = weight.shape
    assert c_in_w == c_in and kh == 1 and 1 <= kw <= w
    w_out = w - kw + 1
    hw = h * w
    hwo = h * w_out
    itemsize = x_nchw.dtype.itemsize

    # Free reshape (metadata only): NCHW -> (N, C_in, H*W).
    x3 = x_nchw.reshape(n, c_in, hw)
    # Tiny weight repack: (C_out, C_in, 1, KW) -> (KW, C_out, C_in).
    w_taps = jnp.transpose(weight[:, :, 0, :], (2, 0, 1))
    b2 = bias.reshape(c_out, 1).astype(jnp.float32)

    n_tile = _pick_n_tile(n, c_in, c_out, hw, hwo, itemsize)
    grid = (n // n_tile,)

    kernel = functools.partial(_eiie_dense_kernel, kernel_width=kw,
                               n_tile=n_tile, h_dim=h, w_dim=w)

    flops = 2 * n * c_out * c_in * kw * h * w_out
    bytes_accessed = (x3.size + w_taps.size + b2.size + n * c_out * hwo) * itemsize

    out3 = pl.pallas_call(
        kernel,
        out_shape=jax.ShapeDtypeStruct((n, c_out, hwo), x_nchw.dtype),
        grid=grid,
        in_specs=[
            pl.BlockSpec((n_tile, c_in, hw), lambda i: (i, 0, 0)),
            pl.BlockSpec((kw, c_out, c_in), lambda i: (0, 0, 0)),
            pl.BlockSpec((c_out, 1), lambda i: (0, 0)),
        ],
        out_specs=pl.BlockSpec((n_tile, c_out, hwo), lambda i: (i, 0, 0)),
        compiler_params=pltpu.CompilerParams(
            dimension_semantics=("parallel",),
            vmem_limit_bytes=32 * 1024 * 1024,
        ),
        cost_estimate=pl.CostEstimate(
            flops=flops, transcendentals=0, bytes_accessed=int(bytes_accessed)),
    )(x3, w_taps, b2)

    # Free reshape: (N, C_out, H*W_out) -> (N, C_out, H, W_out).  No slicing pass.
    return out3.reshape(n, c_out, h, w_out)


def _reference_forward(x_nchw, weight, bias):
    out = lax.conv_general_dilated(
        x_nchw, weight, window_strides=(1, 1), padding="VALID",
        dimension_numbers=("NCHW", "OIHW", "NCHW"))
    out = out + bias[None, :, None, None]
    return jnp.maximum(out, 0.0)


if __name__ == "__main__":
    # Shapes implied by the module: input (N, C_in, H=assets, W=time window),
    # conv kernel (1, kernel_width).
    N, C_IN, H, W = 8, 4, 8, 16
    C_OUT, KW = 8, 3

    key = jax.random.PRNGKey(0)
    kx, kw_, kb = jax.random.split(key, 3)

    x = jax.random.normal(kx, (N, C_IN, H, W), dtype=jnp.float32)
    fan_in = C_IN * 1 * KW
    bound = 1.0 / (fan_in ** 0.5)
    weight = jax.random.uniform(kw_, (C_OUT, C_IN, 1, KW), jnp.float32,
                                minval=-bound, maxval=bound)
    bias = jax.random.uniform(kb, (C_OUT,), jnp.float32,
                              minval=-bound, maxval=bound)

    out = eiie_dense_forward(x, weight, bias)
    out = jax.block_until_ready(out)

    ref = _reference_forward(x, weight, bias)
    assert out.shape == (N, C_OUT, H, W - KW + 1), out.shape
    assert jnp.allclose(out, ref, atol=1e-4, rtol=1e-5), "mismatch vs reference"

    print("KERNEL_OK")
</pallas_src>

<mosaic_0001>
module attributes {stable_mosaic.version = 11 : i64} {
  func.func @_eiie_dense_kernel(%arg0: i32, %arg1: memref<8x4x128xf32, #tpu.memory_space<vmem>>, %arg2: memref<3x8x4xf32, #tpu.memory_space<vmem>>, %arg3: memref<8x1xf32, #tpu.memory_space<vmem>>, %arg4: memref<8x8x112xf32, #tpu.memory_space<vmem>>) attributes {dimension_semantics = [#tpu.dimension_semantics<parallel>], iteration_bounds = array<i64: 1>, scalar_prefetch = 0 : i64, scratch_operands = 0 : i64, tpu.core_type = #tpu.core_type<tc>, window_params = [{transform_indices = @transform_0, window_bounds = array<i64: 8, 4, 128>}, {pipeline_mode = #tpu.pipeline_mode<synchronous>, transform_indices = @transform_1, window_bounds = array<i64: 3, 8, 4>}, {pipeline_mode = #tpu.pipeline_mode<synchronous>, transform_indices = @transform_2, window_bounds = array<i64: 8, 1>}, {transform_indices = @transform_3, window_bounds = array<i64: 8, 8, 112>}]} {
    %c0 = arith.constant 0 : index
    %c0_0 = arith.constant 0 : index
    %c0_1 = arith.constant 0 : index
    %0 = vector.load %arg2[%c0, %c0_0, %c0_1] : memref<3x8x4xf32, #tpu.memory_space<vmem>>, vector<1x8x4xf32>
    %1 = vector.shape_cast %0 : vector<1x8x4xf32> to vector<8x4xf32>
    %c1 = arith.constant 1 : index
    %c0_2 = arith.constant 0 : index
    %c0_3 = arith.constant 0 : index
    %2 = vector.load %arg2[%c1, %c0_2, %c0_3] : memref<3x8x4xf32, #tpu.memory_space<vmem>>, vector<1x8x4xf32>
    %3 = vector.shape_cast %2 : vector<1x8x4xf32> to vector<8x4xf32>
    %c2 = arith.constant 2 : index
    %c0_4 = arith.constant 0 : index
    %c0_5 = arith.constant 0 : index
    %4 = vector.load %arg2[%c2, %c0_4, %c0_5] : memref<3x8x4xf32, #tpu.memory_space<vmem>>, vector<1x8x4xf32>
    %5 = vector.shape_cast %4 : vector<1x8x4xf32> to vector<8x4xf32>
    %c0_6 = arith.constant 0 : index
    %c0_7 = arith.constant 0 : index
    %6 = vector.load %arg3[%c0_6, %c0_7] : memref<8x1xf32, #tpu.memory_space<vmem>>, vector<8x1xf32>
    %7 = vector.shape_cast %6 : vector<8x1xf32> to vector<8x1xf32>
    %8 = vector.broadcast %7 : vector<8x1xf32> to vector<8x126xf32>
    %c0_i32 = arith.constant 0 : i32
    %c8_i32 = arith.constant 8 : i32
    %9 = arith.addi %c0_i32, %c8_i32 : i32
    %c1_i32 = arith.constant 1 : i32
    scf.for %arg5 = %c0_i32 to %9 step %c1_i32  : i32 {
      %10 = arith.index_cast %arg5 : i32 to index
      %c0_9 = arith.constant 0 : index
      %c0_10 = arith.constant 0 : index
      %11 = vector.load %arg1[%10, %c0_9, %c0_10] : memref<8x4x128xf32, #tpu.memory_space<vmem>>, vector<1x4x128xf32>
      %12 = vector.shape_cast %11 : vector<1x4x128xf32> to vector<4x128xf32>
      %13 = vector.extract_strided_slice %12 {offsets = [0, 0], sizes = [4, 126], strides = [1, 1]} : vector<4x128xf32> to vector<4x126xf32>
      %cst = arith.constant dense<0.000000e+00> : vector<8x126xf32>
      %14 = tpu.matmul %1, %13, %cst {dimension_numbers = #tpu.dot_dimension_numbers<[1], [0], [0], [1], [0, 0, 1, 1], [], []>} : vector<8x4xf32>, vector<4x126xf32>, vector<8x126xf32> -> vector<8x126xf32>
      %15 = arith.addf %8, %14 : vector<8x126xf32>
      %16 = vector.extract_strided_slice %12 {offsets = [0, 1], sizes = [4, 126], strides = [1, 1]} : vector<4x128xf32> to vector<4x126xf32>
      %cst_11 = arith.constant dense<0.000000e+00> : vector<8x126xf32>
      %17 = tpu.matmul %3, %16, %cst_11 {dimension_numbers = #tpu.dot_dimension_numbers<[1], [0], [0], [1], [0, 0, 1, 1], [], []>} : vector<8x4xf32>, vector<4x126xf32>, vector<8x126xf32> -> vector<8x126xf32>
      %18 = arith.addf %15, %17 : vector<8x126xf32>
      %19 = vector.extract_strided_slice %12 {offsets = [0, 2], sizes = [4, 126], strides = [1, 1]} : vector<4x128xf32> to vector<4x126xf32>
      %cst_12 = arith.constant dense<0.000000e+00> : vector<8x126xf32>
      %20 = tpu.matmul %5, %19, %cst_12 {dimension_numbers = #tpu.dot_dimension_numbers<[1], [0], [0], [1], [0, 0, 1, 1], [], []>} : vector<8x4xf32>, vector<4x126xf32>, vector<8x126xf32> -> vector<8x126xf32>
      %21 = arith.addf %18, %20 : vector<8x126xf32>
      %cst_13 = arith.constant 0.000000e+00 : f32
      %22 = vector.broadcast %cst_13 : f32 to vector<8x126xf32>
      %23 = arith.maximumf %21, %22 : vector<8x126xf32>
      %24 = vector.extract_strided_slice %23 {offsets = [0, 0], sizes = [8, 14], strides = [1, 1]} : vector<8x126xf32> to vector<8x14xf32>
      %25 = vector.extract_strided_slice %23 {offsets = [0, 16], sizes = [8, 14], strides = [1, 1]} : vector<8x126xf32> to vector<8x14xf32>
      %26 = vector.extract_strided_slice %23 {offsets = [0, 32], sizes = [8, 14], strides = [1, 1]} : vector<8x126xf32> to vector<8x14xf32>
      %27 = vector.extract_strided_slice %23 {offsets = [0, 48], sizes = [8, 14], strides = [1, 1]} : vector<8x126xf32> to vector<8x14xf32>
      %28 = vector.extract_strided_slice %23 {offsets = [0, 64], sizes = [8, 14], strides = [1, 1]} : vector<8x126xf32> to vector<8x14xf32>
      %29 = vector.extract_strided_slice %23 {offsets = [0, 80], sizes = [8, 14], strides = [1, 1]} : vector<8x126xf32> to vector<8x14xf32>
      %30 = vector.extract_strided_slice %23 {offsets = [0, 96], sizes = [8, 14], strides = [1, 1]} : vector<8x126xf32> to vector<8x14xf32>
      %31 = vector.extract_strided_slice %23 {offsets = [0, 112], sizes = [8, 14], strides = [1, 1]} : vector<8x126xf32> to vector<8x14xf32>
      %32 = tpu.concatenate %24, %25, %26, %27, %28, %29, %30, %31 in 1 : vector<8x14xf32>, vector<8x14xf32>, vector<8x14xf32>, vector<8x14xf32>, vector<8x14xf32>, vector<8x14xf32>, vector<8x14xf32>, vector<8x14xf32> -> vector<8x112xf32>
      %33 = arith.index_cast %arg5 : i32 to index
      %c0_14 = arith.constant 0 : index
      %c0_15 = arith.constant 0 : index
      %34 = vector.load %arg4[%33, %c0_14, %c0_15] : memref<8x8x112xf32, #tpu.memory_space<vmem>>, vector<1x8x112xf32>
      %35 = vector.shape_cast %34 : vector<1x8x112xf32> to vector<8x112xf32>
      %36 = vector.shape_cast %32 : vector<8x112xf32> to vector<1x8x112xf32>
      tpu.vector_store %arg4[%33, %c0_14, %c0_15], %36 {strides = array<i32>} : memref<8x8x112xf32, #tpu.memory_space<vmem>>, vector<1x8x112xf32>,
    }
    %c8_i32_8 = arith.constant 8 : i32
    return
  }
  func.func @transform_0(%arg0: i32) -> (i32, i32, i32) {
    %c0_i32 = arith.constant 0 : i32
    %c0_i32_0 = arith.constant 0 : i32
    %c0_i32_1 = arith.constant 0 : i32
    return %arg0, %c0_i32, %c0_i32_0 : i32, i32, i32
  }
  func.func @transform_1(%arg0: i32) -> (i32, i32, i32) {
    %c0_i32 = arith.constant 0 : i32
    %c0_i32_0 = arith.constant 0 : i32
    %c0_i32_1 = arith.constant 0 : i32
    %c0_i32_2 = arith.constant 0 : i32
    return %c0_i32, %c0_i32_0, %c0_i32_1 : i32, i32, i32
  }
  func.func @transform_2(%arg0: i32) -> (i32, i32) {
    %c0_i32 = arith.constant 0 : i32
    %c0_i32_0 = arith.constant 0 : i32
    %c0_i32_1 = arith.constant 0 : i32
    return %c0_i32, %c0_i32_0 : i32, i32
  }
  func.func @transform_3(%arg0: i32) -> (i32, i32, i32) {
    %c0_i32 = arith.constant 0 : i32
    %c0_i32_0 = arith.constant 0 : i32
    %c0_i32_1 = arith.constant 0 : i32
    return %arg0, %c0_i32, %c0_i32_0 : i32, i32, i32
  }
}

</mosaic_0001>

<llo_original>
// kernel: tpu_custom_call.1
$region0: #{tpu_custom_call.1}
  #allocation0 [shape = 'u32[]', space=smem, size = 0x4, offset = 0x4, fixed_abs, tag = 'smem constant byte address 0x4 - core index']
  #allocation1 [shape = 'u32[72,128]{1,0:T(1,128)}', space=vmem, size = 0x9000, scoped, tag = 'internal scratch']
  %s0 = inlined_call_operand.vmem [shape: f32[8,4,128], index: 0, kind: input, shape index: {}]
  %s1 = inlined_call_operand.vmem [shape: f32[3,8,4], index: 1, kind: input, shape index: {}]
  %s2 = inlined_call_operand.vmem [shape: f32[8,1], index: 2, kind: input, shape index: {}]
  %s3 = inlined_call_operand.hbm [shape: f32[8,8,112], index: 3, kind: output, shape index: {}]
  %s4 = sld [smem:[#allocation0]]
  $region29: #{tpu_custom_call.1} parent=0
    _
  %s6 = ssub.s32 1, %s4
  %s7 = scalar_select 0, %s6, %s4
  $region1: #{tpu_custom_call.1} parent=0
    #allocation2 [shape = 'u8[32768]{0}', space=vmem, size = 0x8000, scoped, tag = 'output window, operand 0, single buffered']
    #allocation3 [shape = 's32[1]{0}', space=sflag, size = 0x4, scoped, tag = 'scoped memory for tpu_custom_call.1']
    %8 = vsyncpa [#allocation3], 0
    // Predicated region
    $region2: #{tpu_custom_call.1} parent=1 // pred_check
      _
    $region3: #{tpu_custom_call.1} parent=1 // pred_check_branch
      %10 = sbr.rel (0) target = $region5
    $region4: #{tpu_custom_call.1} parent=1 // pred_region
      _
    $region5: #{tpu_custom_call.1} parent=1 // pred_fallthru
      _
    // Predicated region
    $region6: #{tpu_custom_call.1} parent=1 // pred_check
      _
    $region7: #{tpu_custom_call.1} parent=1 // pred_check_branch
      %12 = sbr.rel (0) target = $region9
    $region8: #{tpu_custom_call.1} parent=1 // pred_region
      _
    $region9: #{tpu_custom_call.1} parent=1 // pred_fallthru
      _
    // Predicated region
    $region10: #{tpu_custom_call.1} parent=1 // pred_check
      _
    $region11: #{tpu_custom_call.1} parent=1 // pred_check_branch
      %14 = sbr.rel (0) target = $region13
    $region12: #{tpu_custom_call.1} parent=1 // pred_region
      _
    $region13: #{tpu_custom_call.1} parent=1 // pred_fallthru
      _
    %v15 = vld [vmem:[%s1] sm:$0xff]
    %s16 = scalar_lea.vmem %s1, 8
    %v17 = vld [vmem:[%s16] sm:$0xff]
    %s18 = scalar_lea.vmem %s1, 16
    %v19 = vld [vmem:[%s18] sm:$0xff]
    %v20 = vld [vmem:[%s2] sm:$0xff]
    %22 = vset.pattern.permute.xlu0 0
    %23 = vperm.xlu0 %22, %v20
    %v24 = vpop.permute.xlu0 %23
    loop: start=0, step=1, limit=8
    $region14: #{tpu_custom_call.1} parent=1 // loop_pre_header
      _
    $region15: #{tpu_custom_call.1} parent=1 // loop_header
      %s27 = sphi 0, %s31
      %p28 = scmp.ge.s32.totalorder %s27, 8
    $region16: #{tpu_custom_call.1} parent=1 // loop_header_branch
      %30 = sbr.rel (%p28) target = $region20
    $region17: #{tpu_custom_call.1} parent=1 // loop_body
      %s32 = smul.u32 %s27, 4
      %s33 = scalar_lea.vmem %s0, %s32
      %v34 = vld [vmem:[%s33] sm:$0xf]
      %vm35 = vcmask 31744
      %v37 = vsel %vm35, %v15, 0
      %vm39 = vcmask 1043456
      %v41 = vsel %vm39, %v34, 0
      %43 = vmatpush.msra.mxu0 0.0
      %44 = vmatpush.msra.mxu0 0.0
      %45 = vmatpush.msra.mxu0 0.0
      %46 = vmatpush.msra.mxu0 0.0
      %47 = vmatpush.msra.mxu0 0.0
      %48 = vmatpush.msra.mxu0 0.0
      %49 = vmatpush.msra.mxu0 0.0
      %50 = vmatpush.msra.mxu0 0.0
      %51 = vmatpush.msra.mxu0 0.0
      %52 = vmatpush.msra.mxu0 0.0
      %53 = vmatpush.msra.mxu0 0.0
      %54 = vmatpush.msra.mxu0 0.0
      %55 = vmatpush.msra.mxu0 0.0
      %56 = vmatpush.msra.mxu0 0.0
      %57 = vmatpush.msra.mxu0 0.0
      %58 = vmatpush.msra.mxu0 %v41
      %59 = vmatmul.f32.gmra.mxu0 %v37
      %v60 = vpop.f32.mrf.mxu0
      %v61 = vadd.f32 0.0, %v60
      %62 = vdwg.mxu0
      %v63 = vadd.f32 %v24, %v61
      %64 = vrot.lane.b32.xlu0 %v34, 127
      %v65 = vpop.permute.xlu0 %64
      %v67 = vsel %vm35, %v17, 0
      %v69 = vsel %vm39, %v65, 0
      %71 = vmatpush.msra.mxu0 0.0
      %72 = vmatpush.msra.mxu0 0.0
      %73 = vmatpush.msra.mxu0 0.0
      %74 = vmatpush.msra.mxu0 0.0
      %75 = vmatpush.msra.mxu0 0.0
      %76 = vmatpush.msra.mxu0 0.0
      %77 = vmatpush.msra.mxu0 0.0
      %78 = vmatpush.msra.mxu0 0.0
      %79 = vmatpush.msra.mxu0 0.0
      %80 = vmatpush.msra.mxu0 0.0
      %81 = vmatpush.msra.mxu0 0.0
      %82 = vmatpush.msra.mxu0 0.0
      %83 = vmatpush.msra.mxu0 0.0
      %84 = vmatpush.msra.mxu0 0.0
      %85 = vmatpush.msra.mxu0 0.0
      %86 = vmatpush.msra.mxu0 %v69
      %87 = vmatmul.f32.gmra.mxu0 %v67
      %v88 = vpop.f32.mrf.mxu0
      %v89 = vadd.f32 0.0, %v88
      %90 = vdwg.mxu0
      %v91 = vadd.f32 %v63, %v89
      %92 = vrot.lane.b32.xlu0 %v34, 126
      %v93 = vpop.permute.xlu0 %92
      %v95 = vsel %vm35, %v19, 0
      %v97 = vsel %vm39, %v93, 0
      %99 = vmatpush.msra.mxu0 0.0
      %100 = vmatpush.msra.mxu0 0.0
      %101 = vmatpush.msra.mxu0 0.0
      %102 = vmatpush.msra.mxu0 0.0
      %103 = vmatpush.msra.mxu0 0.0
      %104 = vmatpush.msra.mxu0 0.0
      %105 = vmatpush.msra.mxu0 0.0
      %106 = vmatpush.msra.mxu0 0.0
      %107 = vmatpush.msra.mxu0 0.0
      %108 = vmatpush.msra.mxu0 0.0
      %109 = vmatpush.msra.mxu0 0.0
      %110 = vmatpush.msra.mxu0 0.0
      %111 = vmatpush.msra.mxu0 0.0
      %112 = vmatpush.msra.mxu0 0.0
      %113 = vmatpush.msra.mxu0 0.0
      %114 = vmatpush.msra.mxu0 %v97
      %115 = vmatmul.f32.gmra.mxu0 %v95
      %v116 = vpop.f32.mrf.mxu0
      %v117 = vadd.f32 0.0, %v116
      %118 = vdwg.mxu0
      %v119 = vadd.f32 %v91, %v117
      %v120 = vmax.f32 %v119, 0.0
      %122 = vrot.lane.b32.xlu0 %v120, 126
      %v123 = vpop.permute.xlu0 %122
      %125 = vrot.lane.b32.xlu0 %v120, 124
      %v126 = vpop.permute.xlu0 %125
      %128 = vrot.lane.b32.xlu0 %v120, 122
      %v129 = vpop.permute.xlu0 %128
      %131 = vrot.lane.b32.xlu0 %v120, 120
      %v132 = vpop.permute.xlu0 %131
      %134 = vrot.lane.b32.xlu0 %v120, 118
      %v135 = vpop.permute.xlu0 %134
      %137 = vrot.lane.b32.xlu0 %v120, 116
      %v138 = vpop.permute.xlu0 %137
      %140 = vrot.lane.b32.xlu0 %v120, 114
      %v141 = vpop.permute.xlu0 %140
      %vm143 = vcmask 113664
      %v144 = vsel %vm143, %v120, %v123
      %vm145 = vcmask 228352
      %v146 = vsel %vm145, %v144, %v126
      %vm147 = vcmask 343040
      %v148 = vsel %vm147, %v146, %v129
      %vm149 = vcmask 457728
      %v150 = vsel %vm149, %v148, %v132
      %vm151 = vcmask 572416
      %v152 = vsel %vm151, %v150, %v135
      %vm153 = vcmask 687104
      %v154 = vsel %vm153, %v152, %v138
      %vm155 = vcmask 801792
      %v156 = vsel %vm155, %v154, %v141
      %s157 = smul.u32 %s27, 8
      %s158 = scalar_lea.vmem [#allocation2], %s157
      %vm159 = vcmask 916480
      %160 = vst.msk [vmem:[%s158] sm:$0xff] %vm159, %v156
    $region18: #{tpu_custom_call.1} parent=1 // loop_footer
      %s31 = sadd.s32 1, %s27
    $region19: #{tpu_custom_call.1} parent=1 // loop_footer_branch
      %26 = sbr.rel target = $region15
    $region20: #{tpu_custom_call.1} parent=1 // loop_exit
      _
    // Predicated region
    $region21: #{tpu_custom_call.1} parent=1 // pred_check
      _
    $region22: #{tpu_custom_call.1} parent=1 // pred_check_branch
      %162 = sbr.rel (0) target = $region24
    $region23: #{tpu_custom_call.1} parent=1 // pred_region
      %164 = vsyncadd [#allocation3], 0
      %s165 = sshll.u32 [#allocation2], 4
      %s166 = int_to_ptr.vmem [resolvable:$true] %s165
      %s167 = sshll.u32 %s3, 4
      %s168 = int_to_ptr.hbm [resolvable:$true] %s167
      %173 = dma.vmem_to_hbm [thread:$0]  %s166, 1024, %s168, [#allocation3], 128, 128, 8
    $region24: #{tpu_custom_call.1} parent=1 // pred_fallthru
      _
    // Predicated region
    $region25: #{tpu_custom_call.1} parent=1 // pred_check
      _
    $region26: #{tpu_custom_call.1} parent=1 // pred_check_branch
      %175 = sbr.rel (0) target = $region28
    $region27: #{tpu_custom_call.1} parent=1 // pred_region
      %177 = dma.done [#allocation3], 1024
    $region28: #{tpu_custom_call.1} parent=1 // pred_fallthru
      _
    %178 = vsyncpa [#allocation3], 1

</llo_original>
